<compile_context>
chip_gen: v7x
topology: tpu7x:2x2x1
jax: 0.10.0
libtpu: 0.0.40
codegen_flags: <defaults>
</compile_context>

<pallas_src>
import jax
import jax.numpy as jnp
from jax.experimental import pallas as pl
from jax.experimental.pallas import tpu as pltpu


def lora_classifier_kernel(x_ref, b_ref, a_ref, bias_ref, o_ref):
    # Rank-1 identity: x @ (A @ B)^T = (sum_f x[:, f] * B[0, f]) * A^T
    # Compute the reduction in f32 regardless of input dtype.
    x = x_ref[...].astype(jnp.float32)            # (TM, F)
    b = b_ref[...].astype(jnp.float32)            # (1, F)  broadcast over rows
    s = jnp.sum(x * b, axis=-1, keepdims=True)    # (TM, 1) VPU mul + lane reduce
    a = a_ref[...].astype(jnp.float32)            # (1, C_PAD) lane row
    bias = bias_ref[...].astype(jnp.float32)      # (1, C_PAD)
    out = s * a + bias                            # (TM, C_PAD) broadcast on VPU
    o_ref[...] = jnp.maximum(out, 0.0).astype(o_ref.dtype)


def lora_classifier_forward(x, A, B, bias, *, tm=512):
    """relu(x @ (A @ B).T + bias) via a rank-1 VPU kernel.

    x:    (batch, in_features)
    A:    (n_classes, 1)
    B:    (1, in_features)
    bias: (n_classes,)
    """
    batch, in_features = x.shape
    n_classes = A.shape[0]

    # Lane-dense output: pad class dim to a multiple of 128 (unmasked vst).
    c_pad = ((n_classes + 127) // 128) * 128

    # Batch tile: multiple of 8, capped at tm (memory-bound -> big tiles for DMA overlap).
    batch8 = ((batch + 7) // 8) * 8
    tile_m = min(tm, batch8)
    padded_batch = ((batch + tile_m - 1) // tile_m) * tile_m

    x_p = x if padded_batch == batch else jnp.pad(
        x, ((0, padded_batch - batch), (0, 0)))
    a_row = jnp.pad(A.reshape(1, n_classes),
                    ((0, 0), (0, c_pad - n_classes)))          # (1, C_PAD)
    bias_row = jnp.pad(bias.reshape(1, n_classes),
                       ((0, 0), (0, c_pad - n_classes)))       # (1, C_PAD)
    b_row = B.reshape(1, in_features)                          # (1, F)

    grid = (padded_batch // tile_m,)

    out = pl.pallas_call(
        lora_classifier_kernel,
        out_shape=jax.ShapeDtypeStruct((padded_batch, c_pad), x.dtype),
        grid=grid,
        in_specs=[
            pl.BlockSpec((tile_m, in_features), lambda i: (i, 0)),  # x tile (pipelined)
            pl.BlockSpec((1, in_features), lambda i: (0, 0)),       # B row (VMEM-resident)
            pl.BlockSpec((1, c_pad), lambda i: (0, 0)),             # A as lane row
            pl.BlockSpec((1, c_pad), lambda i: (0, 0)),             # bias row
        ],
        out_specs=pl.BlockSpec((tile_m, c_pad), lambda i: (i, 0)),
        compiler_params=pltpu.CompilerParams(
            dimension_semantics=("parallel",),   # batch tiles shard across TCs on v7x
        ),
    )(x_p, b_row, a_row, bias_row)

    return out[:batch, :n_classes]


def reference_forward(x, A, B, bias):
    w = A @ B
    return jnp.maximum(x @ w.T + bias[None, :], 0.0)


if __name__ == "__main__":
    batch = 8
    in_features = 128
    n_classes = 16

    key = jax.random.PRNGKey(0)
    kx, ka, kb, kbias = jax.random.split(key, 4)

    x = jax.random.normal(kx, (batch, in_features), dtype=jnp.float32)

    # Deterministic kaiming_normal_ (nonlinearity='relu'): std = sqrt(2 / fan_in)
    # A: (n_classes, 1)   -> fan_in = 1           -> std = sqrt(2)
    # B: (1, in_features) -> fan_in = in_features -> std = sqrt(2 / in_features)
    A = jax.random.normal(ka, (n_classes, 1), dtype=jnp.float32) * jnp.sqrt(2.0)
    Bm = jax.random.normal(kb, (1, in_features), dtype=jnp.float32) * jnp.sqrt(
        2.0 / in_features
    )
    # linear_bias is uninitialized in the PyTorch module; init deterministically here.
    bias = jax.random.normal(kbias, (n_classes,), dtype=jnp.float32) * 0.01

    out = lora_classifier_forward(x, A, Bm, bias)
    out = jax.block_until_ready(out)

    ref = reference_forward(x, A, Bm, bias)
    assert out.shape == (batch, n_classes)
    assert jnp.allclose(out, ref, atol=1e-5, rtol=1e-5), "mismatch vs reference"

    print("KERNEL_OK")
</pallas_src>

<mosaic_0001>
module attributes {stable_mosaic.version = 11 : i64} {
  func.func @lora_classifier_kernel(%arg0: i32, %arg1: memref<8x128xf32, #tpu.memory_space<vmem>>, %arg2: memref<1x128xf32, #tpu.memory_space<vmem>>, %arg3: memref<1x128xf32, #tpu.memory_space<vmem>>, %arg4: memref<1x128xf32, #tpu.memory_space<vmem>>, %arg5: memref<8x128xf32, #tpu.memory_space<vmem>>) attributes {dimension_semantics = [#tpu.dimension_semantics<parallel>], iteration_bounds = array<i64: 1>, scalar_prefetch = 0 : i64, scratch_operands = 0 : i64, tpu.core_type = #tpu.core_type<tc>, window_params = [{transform_indices = @transform_0, window_bounds = array<i64: 8, 128>}, {pipeline_mode = #tpu.pipeline_mode<synchronous>, transform_indices = @transform_1, window_bounds = array<i64: 1, 128>}, {pipeline_mode = #tpu.pipeline_mode<synchronous>, transform_indices = @transform_2, window_bounds = array<i64: 1, 128>}, {pipeline_mode = #tpu.pipeline_mode<synchronous>, transform_indices = @transform_3, window_bounds = array<i64: 1, 128>}, {transform_indices = @transform_4, window_bounds = array<i64: 8, 128>}]} {
    %c0 = arith.constant 0 : index
    %c0_0 = arith.constant 0 : index
    %0 = vector.load %arg1[%c0, %c0_0] : memref<8x128xf32, #tpu.memory_space<vmem>>, vector<8x128xf32>
    %c0_1 = arith.constant 0 : index
    %c0_2 = arith.constant 0 : index
    %1 = vector.load %arg2[%c0_1, %c0_2] : memref<1x128xf32, #tpu.memory_space<vmem>>, vector<1x128xf32>
    %2 = vector.broadcast %1 : vector<1x128xf32> to vector<8x128xf32>
    %3 = arith.mulf %0, %2 : vector<8x128xf32>
    %cst = arith.constant dense<0.000000e+00> : vector<8xf32>
    %4 = vector.multi_reduction <add>, %3, %cst [1] : vector<8x128xf32> to vector<8xf32>
    %5 = vector.shape_cast %4 : vector<8xf32> to vector<8x1xf32>
    %c0_3 = arith.constant 0 : index
    %c0_4 = arith.constant 0 : index
    %6 = vector.load %arg3[%c0_3, %c0_4] : memref<1x128xf32, #tpu.memory_space<vmem>>, vector<1x128xf32>
    %c0_5 = arith.constant 0 : index
    %c0_6 = arith.constant 0 : index
    %7 = vector.load %arg4[%c0_5, %c0_6] : memref<1x128xf32, #tpu.memory_space<vmem>>, vector<1x128xf32>
    %8 = vector.broadcast %5 : vector<8x1xf32> to vector<8x128xf32>
    %9 = vector.broadcast %6 : vector<1x128xf32> to vector<8x128xf32>
    %10 = arith.mulf %8, %9 : vector<8x128xf32>
    %11 = vector.broadcast %7 : vector<1x128xf32> to vector<8x128xf32>
    %12 = arith.addf %10, %11 : vector<8x128xf32>
    %cst_7 = arith.constant 0.000000e+00 : f32
    %13 = vector.broadcast %cst_7 : f32 to vector<8x128xf32>
    %14 = arith.maximumf %12, %13 : vector<8x128xf32>
    %c0_8 = arith.constant 0 : index
    %c0_9 = arith.constant 0 : index
    %15 = vector.load %arg5[%c0_8, %c0_9] : memref<8x128xf32, #tpu.memory_space<vmem>>, vector<8x128xf32>
    tpu.vector_store %arg5[%c0_8, %c0_9], %14 {strides = array<i32>} : memref<8x128xf32, #tpu.memory_space<vmem>>, vector<8x128xf32>,
    return
  }
  func.func @transform_0(%arg0: i32) -> (i32, i32) {
    %c0_i32 = arith.constant 0 : i32
    %c0_i32_0 = arith.constant 0 : i32
    return %arg0, %c0_i32 : i32, i32
  }
  func.func @transform_1(%arg0: i32) -> (i32, i32) {
    %c0_i32 = arith.constant 0 : i32
    %c0_i32_0 = arith.constant 0 : i32
    %c0_i32_1 = arith.constant 0 : i32
    return %c0_i32, %c0_i32_0 : i32, i32
  }
  func.func @transform_2(%arg0: i32) -> (i32, i32) {
    %c0_i32 = arith.constant 0 : i32
    %c0_i32_0 = arith.constant 0 : i32
    %c0_i32_1 = arith.constant 0 : i32
    return %c0_i32, %c0_i32_0 : i32, i32
  }
  func.func @transform_3(%arg0: i32) -> (i32, i32) {
    %c0_i32 = arith.constant 0 : i32
    %c0_i32_0 = arith.constant 0 : i32
    %c0_i32_1 = arith.constant 0 : i32
    return %c0_i32, %c0_i32_0 : i32, i32
  }
  func.func @transform_4(%arg0: i32) -> (i32, i32) {
    %c0_i32 = arith.constant 0 : i32
    %c0_i32_0 = arith.constant 0 : i32
    return %arg0, %c0_i32 : i32, i32
  }
}

</mosaic_0001>

<llo_original>
// kernel: tpu_custom_call.1
$region0: #{tpu_custom_call.1}
  #allocation0 [shape = 'u32[]', space=smem, size = 0x4, offset = 0x4, fixed_abs, tag = 'smem constant byte address 0x4 - core index']
  #allocation1 [shape = 'u32[144,128]{1,0:T(1,128)}', space=vmem, size = 0x12000, scoped, tag = 'internal scratch']
  %s0 = inlined_call_operand.hbm [shape: f32[8,128], index: 0, kind: input, shape index: {}]
  %s1 = inlined_call_operand.vmem [shape: f32[1,128], index: 1, kind: input, shape index: {}]
  %s2 = inlined_call_operand.vmem [shape: f32[1,128], index: 2, kind: input, shape index: {}]
  %s3 = inlined_call_operand.vmem [shape: f32[1,128], index: 3, kind: input, shape index: {}]
  %s4 = inlined_call_operand.hbm [shape: f32[8,128], index: 4, kind: output, shape index: {}]
  %s5 = sld [smem:[#allocation0]]
  $region30: #{tpu_custom_call.1} parent=0
    _
  %s7 = ssub.s32 1, %s5
  %s8 = scalar_select 0, %s7, %s5
  $region1: #{tpu_custom_call.1} parent=0
    #allocation2 [shape = 'u8[4096]{0}', space=vmem, size = 0x1000, scoped, tag = 'input window, operand 0, single buffered']
    #allocation3 [shape = 's32[1]{0}', space=sflag, size = 0x4, scoped, tag = 'scoped memory for tpu_custom_call.1']
    #allocation4 [shape = 's32[1]{0}', space=sflag, size = 0x4, scoped, tag = 'scoped memory for tpu_custom_call.1']
    #allocation5 [shape = 'u8[4096]{0}', space=vmem, size = 0x1000, scoped, tag = 'output window, operand 0, single buffered']
    %9 = vsyncpa [#allocation3], 0
    %10 = vsyncpa [#allocation4], 0
    // Predicated region
    $region2: #{tpu_custom_call.1} parent=1 // pred_check
      _
    $region3: #{tpu_custom_call.1} parent=1 // pred_check_branch
      %12 = sbr.rel (0) target = $region5
    $region4: #{tpu_custom_call.1} parent=1 // pred_region
      %s14 = ssub.s32 128, 128
      %15 = vsyncadd [#allocation3], %s14
      %s17 = sshll.u32 [#allocation2], 4
      %s18 = int_to_ptr.vmem [resolvable:$true] %s17
      %20 = dma.hbm_to_vmem [thread:$0]  %s0, 128, %s18, [#allocation3]
    $region5: #{tpu_custom_call.1} parent=1 // pred_fallthru
      _
    // Predicated region
    $region6: #{tpu_custom_call.1} parent=1 // pred_check
      _
    $region7: #{tpu_custom_call.1} parent=1 // pred_check_branch
      %22 = sbr.rel (0) target = $region9
    $region8: #{tpu_custom_call.1} parent=1 // pred_region
      _
    $region9: #{tpu_custom_call.1} parent=1 // pred_fallthru
      _
    // Predicated region
    $region10: #{tpu_custom_call.1} parent=1 // pred_check
      _
    $region11: #{tpu_custom_call.1} parent=1 // pred_check_branch
      %24 = sbr.rel (0) target = $region13
    $region12: #{tpu_custom_call.1} parent=1 // pred_region
      _
    $region13: #{tpu_custom_call.1} parent=1 // pred_fallthru
      _
    // Predicated region
    $region14: #{tpu_custom_call.1} parent=1 // pred_check
      _
    $region15: #{tpu_custom_call.1} parent=1 // pred_check_branch
      %26 = sbr.rel (0) target = $region17
    $region16: #{tpu_custom_call.1} parent=1 // pred_region
      _
    $region17: #{tpu_custom_call.1} parent=1 // pred_fallthru
      _
    // Predicated region
    $region18: #{tpu_custom_call.1} parent=1 // pred_check
      _
    $region19: #{tpu_custom_call.1} parent=1 // pred_check_branch
      %28 = sbr.rel (0) target = $region21
    $region20: #{tpu_custom_call.1} parent=1 // pred_region
      %29 = dma.done [#allocation3], 128
    $region21: #{tpu_custom_call.1} parent=1 // pred_fallthru
      _
    %v30 = vld [vmem:[#allocation2] sm:$0xff]
    %v31 = vld [vmem:[%s1] sm:$0x1]
    %v33 = vlaneseq
    %v34 = vshrl.u32 %v33, 7
    %v35 = vsub.s32 0, %v34
    %v36 = vrot.slane %v31, %v35
    %v38 = vmul.f32 %v30, %v36
    %39 = vadd.xlane.f32.xlu0 %v38
    %v40 = vpop.xlane.xlu0 %39
    %v41 = vld [vmem:[%s2] sm:$0x1]
    %v42 = vld [vmem:[%s3] sm:$0x1]
    %v44 = vlaneseq
    %v45 = vshrl.u32 %v44, 7
    %v46 = vsub.s32 0, %v45
    %v47 = vrot.slane %v41, %v46
    %v49 = vmul.f32 %v40, %v47
    %v51 = vlaneseq
    %v52 = vshrl.u32 %v51, 7
    %v53 = vsub.s32 0, %v52
    %v54 = vrot.slane %v42, %v53
    %v56 = vadd.f32 %v49, %v54
    %v57 = vmax.f32 %v56, 0.0
    %58 = vst [vmem:[#allocation5] sm:$0xff] %v57
    // Predicated region
    $region22: #{tpu_custom_call.1} parent=1 // pred_check
      _
    $region23: #{tpu_custom_call.1} parent=1 // pred_check_branch
      %60 = sbr.rel (0) target = $region25
    $region24: #{tpu_custom_call.1} parent=1 // pred_region
      %s62 = ssub.s32 128, 128
      %63 = vsyncadd [#allocation4], %s62
      %s65 = sshll.u32 [#allocation5], 4
      %s66 = int_to_ptr.vmem [resolvable:$true] %s65
      %68 = dma.vmem_to_hbm [thread:$0]  %s66, 128, %s4, [#allocation4]
    $region25: #{tpu_custom_call.1} parent=1 // pred_fallthru
      _
    // Predicated region
    $region26: #{tpu_custom_call.1} parent=1 // pred_check
      _
    $region27: #{tpu_custom_call.1} parent=1 // pred_check_branch
      %70 = sbr.rel (0) target = $region29
    $region28: #{tpu_custom_call.1} parent=1 // pred_region
      %71 = dma.done [#allocation4], 128
    $region29: #{tpu_custom_call.1} parent=1 // pred_fallthru
      _
    %72 = vsyncpa [#allocation3], 1
    %73 = vsyncpa [#allocation4], 1

</llo_original>
